<compile_context>
chip_gen: v6e
topology: v6e:2x2x1
jax: 0.10.0
libtpu: 0.0.40
codegen_flags: <defaults>
</compile_context>

<pallas_src>
import jax
import jax.numpy as jnp
from jax.experimental import pallas as pl
from jax.experimental.pallas import tpu as pltpu


def _round_up(x, m):
    return (x + m - 1) // m * m


# ----------------------------------------------------------------------------
# Kernel 1: bilinear upsample (align_corners=True) — lane-dense 4-corner lerp
# ----------------------------------------------------------------------------
def _bilerp_kernel(c00, c01, c10, c11, w00, w01, w10, w11, o_ref):
    o_ref[...] = (w00[...] * c00[...] + w01[...] * c01[...]
                  + w10[...] * c10[...] + w11[...] * c11[...])


def upsample_bilinear_align_corners(x_nchw, scale_factor=2):
    """nn.Upsample(scale_factor, 'bilinear', align_corners=True). Returns NHWC f32."""
    N, C, H, W = x_nchw.shape
    Ho, Wo = H * scale_factor, W * scale_factor
    x = x_nchw.astype(jnp.float32)

    def coords(insz, outsz):
        if outsz == 1:
            src = jnp.zeros((outsz,), jnp.float32)
        else:
            src = jnp.arange(outsz, dtype=jnp.float32) * ((insz - 1) / (outsz - 1))
        i0 = jnp.clip(jnp.floor(src).astype(jnp.int32), 0, insz - 1)
        i1 = jnp.clip(i0 + 1, 0, insz - 1)
        return i0, i1, src - i0.astype(jnp.float32)

    y0, y1, fy = coords(H, Ho)
    x0, x1, fx = coords(W, Wo)

    # Corner gathers in NCHW so the flattened slab is (N*C, Ho*Wo):
    # rows = images*channels (sublanes), lanes = spatial -> lane-dense lerp.
    def gather(yi, xi):
        return x[:, :, yi, :][:, :, :, xi].reshape(N * C, Ho * Wo)

    c00, c01 = gather(y0, x0), gather(y0, x1)
    c10, c11 = gather(y1, x0), gather(y1, x1)

    wy, wx = fy[:, None], fx[None, :]
    w00 = ((1.0 - wy) * (1.0 - wx)).reshape(1, Ho * Wo)
    w01 = ((1.0 - wy) * wx).reshape(1, Ho * Wo)
    w10 = (wy * (1.0 - wx)).reshape(1, Ho * Wo)
    w11 = (wy * wx).reshape(1, Ho * Wo)

    NC, HW = N * C, Ho * Wo
    tr = min(_round_up(NC, 8), 256)       # sublane (row) tile
    tl = min(_round_up(HW, 128), 2048)    # lane (spatial) tile
    NCp, HWp = _round_up(NC, tr), _round_up(HW, tl)

    pad_c = lambda a: jnp.pad(a, ((0, NCp - NC), (0, HWp - HW)))
    pad_w = lambda a: jnp.pad(a, ((0, 0), (0, HWp - HW)))

    corner_spec = pl.BlockSpec((tr, tl), lambda i, j: (i, j))
    weight_spec = pl.BlockSpec((1, tl), lambda i, j: (0, j))

    out = pl.pallas_call(
        _bilerp_kernel,
        out_shape=jax.ShapeDtypeStruct((NCp, HWp), jnp.float32),
        grid=(NCp // tr, HWp // tl),
        in_specs=[corner_spec] * 4 + [weight_spec] * 4,
        out_specs=corner_spec,
        compiler_params=pltpu.CompilerParams(
            dimension_semantics=("parallel", "parallel")),
    )(pad_c(c00), pad_c(c01), pad_c(c10), pad_c(c11),
      pad_w(w00), pad_w(w01), pad_w(w10), pad_w(w11))

    out = out[:NC, :HW].reshape(N, C, Ho, Wo)
    return jnp.transpose(out, (0, 2, 3, 1))          # NHWC


# ----------------------------------------------------------------------------
# Kernel 2: fused Conv3x3 (in-kernel 3x3 window, 9 MXU matmuls) + BN + ReLU
# ----------------------------------------------------------------------------
def _conv3x3_bn_relu_kernel(x_ref, w_ref, b_ref, o_ref):
    # x_ref: (1, 1, th+2, W+2, Cin)  bf16 row tile with 1-row/1-col halo
    # w_ref: (9, Cin, tco)           bf16, BN scale already folded in
    # b_ref: (1, tco)                f32 folded BN bias
    # o_ref: (1, th, W, tco)
    th, W, tco = o_ref.shape[1], o_ref.shape[2], o_ref.shape[3]
    cin = x_ref.shape[-1]
    acc = jnp.zeros((th * W, tco), jnp.float32)
    for dy in range(3):
        for dx in range(3):
            patch = x_ref[0, 0, dy:dy + th, dx:dx + W, :].reshape(th * W, cin)
            acc = acc + jnp.dot(patch, w_ref[dy * 3 + dx],
                                preferred_element_type=jnp.float32)
    y = jnp.maximum(acc + b_ref[...], 0.0)
    o_ref[...] = y.reshape(1, th, W, tco).astype(o_ref.dtype)


def conv3x3_bn_relu(x_nhwc, w_hwio, bn_scale, bn_bias, *, out_dtype=jnp.float32,
                    slice_cout=True, tco=128):
    """3x3 conv (pad=1, stride=1, bias=False) + folded eval-mode BN + ReLU.

    The input may carry zero-padded trailing channels (>= w_hwio.shape[2]).
    Output channels are padded to a multiple of `tco` (lane-dense stores);
    padded channels are exactly zero, so they can feed the next conv directly.
    """
    N, H, W, Cin = x_nhwc.shape
    kcin, Cout = w_hwio.shape[2], w_hwio.shape[3]
    Cin_pad = _round_up(Cin, 128)
    Cout_pad = _round_up(Cout, tco)
    Wp = W + 2

    # Fold BN scale into weights; zero-pad Cin (matches zero-padded input
    # channels) and Cout (extra channels compute to exactly 0 after ReLU).
    w = w_hwio.astype(jnp.float32) * bn_scale.astype(jnp.float32)[None, None, None, :]
    w = jnp.pad(w, ((0, 0), (0, 0), (0, Cin_pad - kcin), (0, Cout_pad - Cout)))
    w = w.reshape(9, Cin_pad, Cout_pad).astype(jnp.bfloat16)
    bias = jnp.pad(bn_bias.astype(jnp.float32),
                   (0, Cout_pad - Cout)).reshape(1, Cout_pad)

    # Row-tile size: whole image for small H, otherwise cap the bf16 input
    # block (double-buffered) to stay well inside every generation's VMEM.
    th = H if H <= 32 else 32
    while th > 8 and (th + 2) * Wp * Cin_pad * 2 > 4 * 1024 * 1024:
        th //= 2
    R = -(-H // th)
    Hp = R * th

    # bf16 activation, lane-dense channel padding, spatial halo padding, and
    # overlapping row windows (~(th+2)/th extra bytes — replaces the 9x im2col).
    xb = x_nhwc.astype(jnp.bfloat16)
    if Cin_pad != Cin:
        xb = jnp.pad(xb, ((0, 0), (0, 0), (0, 0), (0, Cin_pad - Cin)))
    xp = jnp.pad(xb, ((0, 0), (1, 1 + Hp - H), (1, 1), (0, 0)))         # (N, Hp+2, Wp, Cin_pad)
    win = jnp.arange(R)[:, None] * th + jnp.arange(th + 2)[None, :]     # (R, th+2)
    x_tiles = xp[:, win]                                                # (N, R, th+2, Wp, Cin_pad)

    out = pl.pallas_call(
        _conv3x3_bn_relu_kernel,
        out_shape=jax.ShapeDtypeStruct((N, Hp, W, Cout_pad), out_dtype),
        grid=(N, R, Cout_pad // tco),
        in_specs=[
            pl.BlockSpec((1, 1, th + 2, Wp, Cin_pad), lambda n, r, c: (n, r, 0, 0, 0)),
            pl.BlockSpec((9, Cin_pad, tco), lambda n, r, c: (0, 0, c)),
            pl.BlockSpec((1, tco), lambda n, r, c: (0, c)),
        ],
        out_specs=pl.BlockSpec((1, th, W, tco), lambda n, r, c: (n, r, 0, c)),
        compiler_params=pltpu.CompilerParams(
            dimension_semantics=("parallel", "parallel", "parallel"),
            vmem_limit_bytes=32 * 1024 * 1024),
    )(x_tiles, w, bias)

    out = out[:, :H]
    if slice_cout:
        out = out[..., :Cout]
    return out


# ----------------------------------------------------------------------------
# Module: parameter init + forward
# ----------------------------------------------------------------------------
def init_up_params(key, in_channels, out_channels):
    ks = jax.random.split(key, 10)
    eps = 1e-5

    def bn_fold(kg, kb, km, kv, c):
        gamma = 1.0 + 0.1 * jax.random.normal(kg, (c,), jnp.float32)
        beta = 0.1 * jax.random.normal(kb, (c,), jnp.float32)
        mean = 0.05 * jax.random.normal(km, (c,), jnp.float32)
        var = jnp.abs(1.0 + 0.1 * jax.random.normal(kv, (c,), jnp.float32))
        scale = gamma / jnp.sqrt(var + eps)
        bias = beta - mean * scale
        return scale, bias

    # conv weights stored HWIO (kh, kw, cin, cout); PyTorch OIHW -> transpose(2,3,1,0)
    w1 = 0.1 * jax.random.normal(ks[0], (3, 3, in_channels, out_channels), jnp.float32)
    w2 = 0.1 * jax.random.normal(ks[1], (3, 3, out_channels, out_channels), jnp.float32)
    s1, b1 = bn_fold(ks[2], ks[3], ks[4], ks[5], out_channels)
    s2, b2 = bn_fold(ks[6], ks[7], ks[8], ks[9], out_channels)
    return {"w1": w1, "s1": s1, "b1": b1, "w2": w2, "s2": s2, "b2": b2}


def up_forward(params, x2_nchw, x1_nchw, scale_factor=2):
    # x1 -> bilinear upsample (align_corners=True), then cat([x2, x1], channel)
    x1_up = upsample_bilinear_align_corners(x1_nchw, scale_factor)        # NHWC f32
    x2_nhwc = jnp.transpose(x2_nchw, (0, 2, 3, 1)).astype(jnp.float32)    # NHWC
    x = jnp.concatenate([x2_nhwc, x1_up], axis=-1)                        # == cat dim=1 in NCHW

    # conv1 keeps its 128-padded Cout (padded channels are exactly 0) and
    # stores bf16, so conv2 reads it once with no re-pack / re-pad / 9x re-read.
    y = conv3x3_bn_relu(x, params["w1"], params["s1"], params["b1"],
                        out_dtype=jnp.bfloat16, slice_cout=False)
    y = conv3x3_bn_relu(y, params["w2"], params["s2"], params["b2"],
                        out_dtype=jnp.float32, slice_cout=True)
    return jnp.transpose(y, (0, 3, 1, 2))                                 # back to NCHW


if __name__ == "__main__":
    key = jax.random.PRNGKey(0)
    k_x2, k_x1, k_p = jax.random.split(key, 3)

    # Small shapes: x2 is the high-res skip, x1 is the low-res map to be upsampled 2x.
    N, C2, H, W = 2, 4, 16, 16
    C1 = 4
    x2 = jax.random.normal(k_x2, (N, C2, H, W), jnp.float32)
    x1 = jax.random.normal(k_x1, (N, C1, H // 2, W // 2), jnp.float32)

    in_channels = C2 + C1          # 8 (after concat)
    out_channels = 8
    params = init_up_params(k_p, in_channels, out_channels)

    out = up_forward(params, x2, x1, scale_factor=2)
    out = jax.block_until_ready(out)
    assert out.shape == (N, out_channels, H, W), out.shape
    print("KERNEL_OK")
</pallas_src>

<mosaic_0001>
module attributes {stable_mosaic.version = 11 : i64} {
  func.func @_bilerp_kernel(%arg0: i32, %arg1: i32, %arg2: memref<8x256xf32, #tpu.memory_space<vmem>>, %arg3: memref<8x256xf32, #tpu.memory_space<vmem>>, %arg4: memref<8x256xf32, #tpu.memory_space<vmem>>, %arg5: memref<8x256xf32, #tpu.memory_space<vmem>>, %arg6: memref<1x256xf32, #tpu.memory_space<vmem>>, %arg7: memref<1x256xf32, #tpu.memory_space<vmem>>, %arg8: memref<1x256xf32, #tpu.memory_space<vmem>>, %arg9: memref<1x256xf32, #tpu.memory_space<vmem>>, %arg10: memref<8x256xf32, #tpu.memory_space<vmem>>) attributes {dimension_semantics = [#tpu.dimension_semantics<parallel>, #tpu.dimension_semantics<parallel>], iteration_bounds = array<i64: 1, 1>, scalar_prefetch = 0 : i64, scratch_operands = 0 : i64, tpu.core_type = #tpu.core_type<tc>, window_params = [{transform_indices = @transform_0, window_bounds = array<i64: 8, 256>}, {transform_indices = @transform_1, window_bounds = array<i64: 8, 256>}, {transform_indices = @transform_2, window_bounds = array<i64: 8, 256>}, {transform_indices = @transform_3, window_bounds = array<i64: 8, 256>}, {transform_indices = @transform_4, window_bounds = array<i64: 1, 256>}, {transform_indices = @transform_5, window_bounds = array<i64: 1, 256>}, {transform_indices = @transform_6, window_bounds = array<i64: 1, 256>}, {transform_indices = @transform_7, window_bounds = array<i64: 1, 256>}, {transform_indices = @transform_8, window_bounds = array<i64: 8, 256>}]} {
    %c0 = arith.constant 0 : index
    %c0_0 = arith.constant 0 : index
    %0 = vector.load %arg6[%c0, %c0_0] : memref<1x256xf32, #tpu.memory_space<vmem>>, vector<1x256xf32>
    %c0_1 = arith.constant 0 : index
    %c0_2 = arith.constant 0 : index
    %1 = vector.load %arg2[%c0_1, %c0_2] : memref<8x256xf32, #tpu.memory_space<vmem>>, vector<8x256xf32>
    %2 = vector.broadcast %0 : vector<1x256xf32> to vector<8x256xf32>
    %3 = arith.mulf %2, %1 : vector<8x256xf32>
    %c0_3 = arith.constant 0 : index
    %c0_4 = arith.constant 0 : index
    %4 = vector.load %arg7[%c0_3, %c0_4] : memref<1x256xf32, #tpu.memory_space<vmem>>, vector<1x256xf32>
    %c0_5 = arith.constant 0 : index
    %c0_6 = arith.constant 0 : index
    %5 = vector.load %arg3[%c0_5, %c0_6] : memref<8x256xf32, #tpu.memory_space<vmem>>, vector<8x256xf32>
    %6 = vector.broadcast %4 : vector<1x256xf32> to vector<8x256xf32>
    %7 = arith.mulf %6, %5 : vector<8x256xf32>
    %8 = arith.addf %3, %7 : vector<8x256xf32>
    %c0_7 = arith.constant 0 : index
    %c0_8 = arith.constant 0 : index
    %9 = vector.load %arg8[%c0_7, %c0_8] : memref<1x256xf32, #tpu.memory_space<vmem>>, vector<1x256xf32>
    %c0_9 = arith.constant 0 : index
    %c0_10 = arith.constant 0 : index
    %10 = vector.load %arg4[%c0_9, %c0_10] : memref<8x256xf32, #tpu.memory_space<vmem>>, vector<8x256xf32>
    %11 = vector.broadcast %9 : vector<1x256xf32> to vector<8x256xf32>
    %12 = arith.mulf %11, %10 : vector<8x256xf32>
    %13 = arith.addf %8, %12 : vector<8x256xf32>
    %c0_11 = arith.constant 0 : index
    %c0_12 = arith.constant 0 : index
    %14 = vector.load %arg9[%c0_11, %c0_12] : memref<1x256xf32, #tpu.memory_space<vmem>>, vector<1x256xf32>
    %c0_13 = arith.constant 0 : index
    %c0_14 = arith.constant 0 : index
    %15 = vector.load %arg5[%c0_13, %c0_14] : memref<8x256xf32, #tpu.memory_space<vmem>>, vector<8x256xf32>
    %16 = vector.broadcast %14 : vector<1x256xf32> to vector<8x256xf32>
    %17 = arith.mulf %16, %15 : vector<8x256xf32>
    %18 = arith.addf %13, %17 : vector<8x256xf32>
    %c0_15 = arith.constant 0 : index
    %c0_16 = arith.constant 0 : index
    %19 = vector.load %arg10[%c0_15, %c0_16] : memref<8x256xf32, #tpu.memory_space<vmem>>, vector<8x256xf32>
    tpu.vector_store %arg10[%c0_15, %c0_16], %18 {strides = array<i32>} : memref<8x256xf32, #tpu.memory_space<vmem>>, vector<8x256xf32>,
    return
  }
  func.func @transform_0(%arg0: i32, %arg1: i32) -> (i32, i32) {
    %c0_i32 = arith.constant 0 : i32
    return %arg0, %arg1 : i32, i32
  }
  func.func @transform_1(%arg0: i32, %arg1: i32) -> (i32, i32) {
    %c0_i32 = arith.constant 0 : i32
    return %arg0, %arg1 : i32, i32
  }
  func.func @transform_2(%arg0: i32, %arg1: i32) -> (i32, i32) {
    %c0_i32 = arith.constant 0 : i32
    return %arg0, %arg1 : i32, i32
  }
  func.func @transform_3(%arg0: i32, %arg1: i32) -> (i32, i32) {
    %c0_i32 = arith.constant 0 : i32
    return %arg0, %arg1 : i32, i32
  }
  func.func @transform_4(%arg0: i32, %arg1: i32) -> (i32, i32) {
    %c0_i32 = arith.constant 0 : i32
    %c0_i32_0 = arith.constant 0 : i32
    return %c0_i32, %arg1 : i32, i32
  }
  func.func @transform_5(%arg0: i32, %arg1: i32) -> (i32, i32) {
    %c0_i32 = arith.constant 0 : i32
    %c0_i32_0 = arith.constant 0 : i32
    return %c0_i32, %arg1 : i32, i32
  }
  func.func @transform_6(%arg0: i32, %arg1: i32) -> (i32, i32) {
    %c0_i32 = arith.constant 0 : i32
    %c0_i32_0 = arith.constant 0 : i32
    return %c0_i32, %arg1 : i32, i32
  }
  func.func @transform_7(%arg0: i32, %arg1: i32) -> (i32, i32) {
    %c0_i32 = arith.constant 0 : i32
    %c0_i32_0 = arith.constant 0 : i32
    return %c0_i32, %arg1 : i32, i32
  }
  func.func @transform_8(%arg0: i32, %arg1: i32) -> (i32, i32) {
    %c0_i32 = arith.constant 0 : i32
    return %arg0, %arg1 : i32, i32
  }
}

</mosaic_0001>

<llo_original>
// kernel: tpu_custom_call.1
$region0: #{tpu_custom_call.1}
  #allocation0 [shape = 'u32[]', space=smem, size = 0x4, offset = 0x4, fixed_abs, tag = 'smem constant byte address 0x4 - core index']
  #allocation1 [shape = 'u32[144,128]{1,0:T(1,128)}', space=vmem, size = 0x12000, scoped, tag = 'internal scratch']
  %s0 = inlined_call_operand.hbm [shape: f32[8,256], index: 0, kind: input, shape index: {}]
  %s1 = inlined_call_operand.hbm [shape: f32[8,256], index: 1, kind: input, shape index: {}]
  %s2 = inlined_call_operand.hbm [shape: f32[8,256], index: 2, kind: input, shape index: {}]
  %s3 = inlined_call_operand.hbm [shape: f32[8,256], index: 3, kind: input, shape index: {}]
  %s4 = inlined_call_operand.vmem [shape: f32[1,256], index: 4, kind: input, shape index: {}]
  %s5 = inlined_call_operand.vmem [shape: f32[1,256], index: 5, kind: input, shape index: {}]
  %s6 = inlined_call_operand.vmem [shape: f32[1,256], index: 6, kind: input, shape index: {}]
  %s7 = inlined_call_operand.vmem [shape: f32[1,256], index: 7, kind: input, shape index: {}]
  %s8 = inlined_call_operand.hbm [shape: f32[8,256], index: 8, kind: output, shape index: {}]
  %s9 = sld [smem:[#allocation0]]
  $region58: #{tpu_custom_call.1} parent=0
    _
  %s11 = ssub.s32 1, %s9
  %s12 = scalar_select 0, %s11, %s9
  $region1: #{tpu_custom_call.1} parent=0
    #allocation2 [shape = 'u8[8192]{0}', space=vmem, size = 0x2000, scoped, tag = 'input window, operand 0, single buffered']
    #allocation3 [shape = 's32[1]{0}', space=sflag, size = 0x4, scoped, tag = 'scoped memory for tpu_custom_call.1']
    #allocation4 [shape = 's32[1]{0}', space=sflag, size = 0x4, scoped, tag = 'scoped memory for tpu_custom_call.1']
    #allocation5 [shape = 'u8[8192]{0}', space=vmem, size = 0x2000, scoped, tag = 'input window, operand 1, single buffered']
    #allocation6 [shape = 's32[1]{0}', space=sflag, size = 0x4, scoped, tag = 'scoped memory for tpu_custom_call.1']
    #allocation7 [shape = 'u8[8192]{0}', space=vmem, size = 0x2000, scoped, tag = 'input window, operand 2, single buffered']
    #allocation8 [shape = 'u8[8192]{0}', space=vmem, size = 0x2000, scoped, tag = 'input window, operand 3, single buffered']
    #allocation9 [shape = 's32[1]{0}', space=sflag, size = 0x4, scoped, tag = 'scoped memory for tpu_custom_call.1']
    #allocation10 [shape = 'u8[8192]{0}', space=vmem, size = 0x2000, scoped, tag = 'output window, operand 0, single buffered']
    %13 = vsyncpa [#allocation3], 0
    %14 = vsyncpa [#allocation6], 0
    %15 = vsyncpa [#allocation9], 0
    %16 = vsyncpa [#allocation4], 0
    // Predicated region
    $region2: #{tpu_custom_call.1} parent=1 // pred_check
      _
    $region3: #{tpu_custom_call.1} parent=1 // pred_check_branch
      %18 = sbr.rel (0) target = $region5
    $region4: #{tpu_custom_call.1} parent=1 // pred_region
      %s20 = ssub.s32 256, 256
      %21 = vsyncadd [#allocation3], %s20
      %s23 = sshll.u32 [#allocation2], 4
      %s24 = int_to_ptr.vmem [resolvable:$true] %s23
      %26 = dma.hbm_to_vmem [thread:$0]  %s0, 256, %s24, [#allocation3]
    $region5: #{tpu_custom_call.1} parent=1 // pred_fallthru
      _
    // Predicated region
    $region6: #{tpu_custom_call.1} parent=1 // pred_check
      _
    $region7: #{tpu_custom_call.1} parent=1 // pred_check_branch
      %28 = sbr.rel (0) target = $region9
    $region8: #{tpu_custom_call.1} parent=1 // pred_region
      %s30 = ssub.s32 256, 256
      %31 = vsyncadd [#allocation6], %s30
      %s33 = sshll.u32 [#allocation5], 4
      %s34 = int_to_ptr.vmem [resolvable:$true] %s33
      %36 = dma.hbm_to_vmem [thread:$0]  %s1, 256, %s34, [#allocation6]
    $region9: #{tpu_custom_call.1} parent=1 // pred_fallthru
      _
    // Predicated region
    $region10: #{tpu_custom_call.1} parent=1 // pred_check
      _
    $region11: #{tpu_custom_call.1} parent=1 // pred_check_branch
      %38 = sbr.rel (0) target = $region13
    $region12: #{tpu_custom_call.1} parent=1 // pred_region
      %s40 = ssub.s32 256, 256
      %41 = vsyncadd [#allocation6], %s40
      %s43 = sshll.u32 [#allocation7], 4
      %s44 = int_to_ptr.vmem [resolvable:$true] %s43
      %46 = dma.hbm_to_vmem [thread:$0]  %s2, 256, %s44, [#allocation6]
    $region13: #{tpu_custom_call.1} parent=1 // pred_fallthru
      _
    // Predicated region
    $region14: #{tpu_custom_call.1} parent=1 // pred_check
      _
    $region15: #{tpu_custom_call.1} parent=1 // pred_check_branch
      %48 = sbr.rel (0) target = $region17
    $region16: #{tpu_custom_call.1} parent=1 // pred_region
      %s50 = ssub.s32 256, 256
      %51 = vsyncadd [#allocation9], %s50
      %s53 = sshll.u32 [#allocation8], 4
      %s54 = int_to_ptr.vmem [resolvable:$true] %s53
      %56 = dma.hbm_to_vmem [thread:$0]  %s3, 256, %s54, [#allocation9]
    $region17: #{tpu_custom_call.1} parent=1 // pred_fallthru
      _
    // Predicated region
    $region18: #{tpu_custom_call.1} parent=1 // pred_check
      _
    $region19: #{tpu_custom_call.1} parent=1 // pred_check_branch
      %58 = sbr.rel (0) target = $region21
    $region20: #{tpu_custom_call.1} parent=1 // pred_region
      _
    $region21: #{tpu_custom_call.1} parent=1 // pred_fallthru
      _
    // Predicated region
    $region22: #{tpu_custom_call.1} parent=1 // pred_check
      _
    $region23: #{tpu_custom_call.1} parent=1 // pred_check_branch
      %60 = sbr.rel (0) target = $region25
    $region24: #{tpu_custom_call.1} parent=1 // pred_region
      _
    $region25: #{tpu_custom_call.1} parent=1 // pred_fallthru
      _
    // Predicated region
    $region26: #{tpu_custom_call.1} parent=1 // pred_check
      _
    $region27: #{tpu_custom_call.1} parent=1 // pred_check_branch
      %62 = sbr.rel (0) target = $region29
    $region28: #{tpu_custom_call.1} parent=1 // pred_region
      _
    $region29: #{tpu_custom_call.1} parent=1 // pred_fallthru
      _
    // Predicated region
    $region30: #{tpu_custom_call.1} parent=1 // pred_check
      _
    $region31: #{tpu_custom_call.1} parent=1 // pred_check_branch
      %64 = sbr.rel (0) target = $region33
    $region32: #{tpu_custom_call.1} parent=1 // pred_region
      _
    $region33: #{tpu_custom_call.1} parent=1 // pred_fallthru
      _
    // Predicated region
    $region34: #{tpu_custom_call.1} parent=1 // pred_check
      _
    $region35: #{tpu_custom_call.1} parent=1 // pred_check_branch
      %66 = sbr.rel (0) target = $region37
    $region36: #{tpu_custom_call.1} parent=1 // pred_region
      %67 = dma.done [#allocation3], 256
    $region37: #{tpu_custom_call.1} parent=1 // pred_fallthru
      _
    // Predicated region
    $region38: #{tpu_custom_call.1} parent=1 // pred_check
      _
    $region39: #{tpu_custom_call.1} parent=1 // pred_check_branch
      %69 = sbr.rel (0) target = $region41
    $region40: #{tpu_custom_call.1} parent=1 // pred_region
      %70 = dma.done [#allocation6], 256
    $region41: #{tpu_custom_call.1} parent=1 // pred_fallthru
      _
    // Predicated region
    $region42: #{tpu_custom_call.1} parent=1 // pred_check
      _
    $region43: #{tpu_custom_call.1} parent=1 // pred_check_branch
      %72 = sbr.rel (0) target = $region45
    $region44: #{tpu_custom_call.1} parent=1 // pred_region
      %73 = dma.done [#allocation6], 256
    $region45: #{tpu_custom_call.1} parent=1 // pred_fallthru
      _
    // Predicated region
    $region46: #{tpu_custom_call.1} parent=1 // pred_check
      _
    $region47: #{tpu_custom_call.1} parent=1 // pred_check_branch
      %75 = sbr.rel (0) target = $region49
    $region48: #{tpu_custom_call.1} parent=1 // pred_region
      %76 = dma.done [#allocation9], 256
    $region49: #{tpu_custom_call.1} parent=1 // pred_fallthru
      _
    %v77 = vld [vmem:[%s4] sm:$0x3]
    %v78 = vld [vmem:[#allocation2] sm:$0xff]
    %v79 = vld [vmem:[#allocation2 + $0x8] sm:$0xff]
    %v81 = vlaneseq
    %v82 = vshrl.u32 %v81, 7
    %v83 = vsub.s32 0, %v82
    %v84 = vrot.slane %v77, %v83
    %v85 = vlaneseq
    %v86 = vshrl.u32 %v85, 7
    %v87 = vsub.s32 1, %v86
    %v88 = vrot.slane %v77, %v87
    %v91 = vmul.f32 %v84, %v78
    %v92 = vmul.f32 %v88, %v79
    %v93 = vld [vmem:[%s5] sm:$0x3]
    %v94 = vld [vmem:[#allocation5] sm:$0xff]
    %v95 = vld [vmem:[#allocation5 + $0x8] sm:$0xff]
    %v97 = vlaneseq
    %v98 = vshrl.u32 %v97, 7
    %v99 = vsub.s32 0, %v98
    %v100 = vrot.slane %v93, %v99
    %v101 = vlaneseq
    %v102 = vshrl.u32 %v101, 7
    %v103 = vsub.s32 1, %v102
    %v104 = vrot.slane %v93, %v103
    %v107 = vmul.f32 %v100, %v94
    %v108 = vmul.f32 %v104, %v95
    %v109 = vadd.f32 %v91, %v107
    %v110 = vadd.f32 %v92, %v108
    %v111 = vld [vmem:[%s6] sm:$0x3]
    %v112 = vld [vmem:[#allocation7] sm:$0xff]
    %v113 = vld [vmem:[#allocation7 + $0x8] sm:$0xff]
    %v115 = vlaneseq
    %v116 = vshrl.u32 %v115, 7
    %v117 = vsub.s32 0, %v116
    %v118 = vrot.slane %v111, %v117
    %v119 = vlaneseq
    %v120 = vshrl.u32 %v119, 7
    %v121 = vsub.s32 1, %v120
    %v122 = vrot.slane %v111, %v121
    %v125 = vmul.f32 %v118, %v112
    %v126 = vmul.f32 %v122, %v113
    %v127 = vadd.f32 %v109, %v125
    %v128 = vadd.f32 %v110, %v126
    %v129 = vld [vmem:[%s7] sm:$0x3]
    %v130 = vld [vmem:[#allocation8] sm:$0xff]
    %v131 = vld [vmem:[#allocation8 + $0x8] sm:$0xff]
    %v133 = vlaneseq
    %v134 = vshrl.u32 %v133, 7
    %v135 = vsub.s32 0, %v134
    %v136 = vrot.slane %v129, %v135
    %v137 = vlaneseq
    %v138 = vshrl.u32 %v137, 7
    %v139 = vsub.s32 1, %v138
    %v140 = vrot.slane %v129, %v139
    %v143 = vmul.f32 %v136, %v130
    %v144 = vmul.f32 %v140, %v131
    %v145 = vadd.f32 %v127, %v143
    %v146 = vadd.f32 %v128, %v144
    %147 = vst [vmem:[#allocation10] sm:$0xff] %v145
    %148 = vst [vmem:[#allocation10 + $0x8] sm:$0xff] %v146
    // Predicated region
    $region50: #{tpu_custom_call.1} parent=1 // pred_check
      _
    $region51: #{tpu_custom_call.1} parent=1 // pred_check_branch
      %150 = sbr.rel (0) target = $region53
    $region52: #{tpu_custom_call.1} parent=1 // pred_region
      %s152 = ssub.s32 256, 256
      %153 = vsyncadd [#allocation4], %s152
      %s155 = sshll.u32 [#allocation10], 4
      %s156 = int_to_ptr.vmem [resolvable:$true] %s155
      %158 = dma.vmem_to_hbm [thread:$0]  %s156, 256, %s8, [#allocation4]
    $region53: #{tpu_custom_call.1} parent=1 // pred_fallthru
      _
    // Predicated region
    $region54: #{tpu_custom_call.1} parent=1 // pred_check
      _
    $region55: #{tpu_custom_call.1} parent=1 // pred_check_branch
      %160 = sbr.rel (0) target = $region57
    $region56: #{tpu_custom_call.1} parent=1 // pred_region
      %161 = dma.done [#allocation4], 256
    $region57: #{tpu_custom_call.1} parent=1 // pred_fallthru
      _
    %162 = vsyncpa [#allocation3], 1
    %163 = vsyncpa [#allocation6], 1
    %164 = vsyncpa [#allocation9], 1
    %165 = vsyncpa [#allocation4], 1

</llo_original>
